<compile_context>
chip_gen: v6e
topology: v6e:2x2x1
jax: 0.10.0
libtpu: 0.0.40
codegen_flags: <defaults>
</compile_context>

<pallas_src>
import functools

import jax
import jax.numpy as jnp
from jax.experimental import pallas as pl
from jax.experimental.pallas import tpu as pltpu

_EPS = 1e-15


def _cll_kernel(*refs, reduction, use_weights, actual_b, tile_b):
    if use_weights:
        y_pred_ref, y_true_ref, w_ref, out_ref = refs
    else:
        y_pred_ref, y_true_ref, out_ref = refs
        w_ref = None

    yp = y_pred_ref[...]                    # [C, TB] float32 (batch on lanes)
    yt = y_true_ref[...]                    # [1, TB] int32
    C, TB = yp.shape

    # Gather y_pred[y_true[b], b] via sublane one-hot select + sublane reduce.
    row = jax.lax.broadcasted_iota(jnp.int32, (C, TB), 0)          # [C, TB]
    match = (row == yt)                                            # [C, TB]
    gathered = jnp.sum(jnp.where(match, yp, 0.0), axis=0,
                       keepdims=True)                              # [1, TB]

    lik = jnp.clip(gathered, _EPS, 1.0 - _EPS)
    nll = -jnp.log(lik)                                            # [1, TB]

    if use_weights:
        w_sel = jnp.sum(jnp.where(match, w_ref[...], 0.0), axis=0,
                        keepdims=True)                             # [1, TB]
        nll = nll * w_sel

    if reduction == 'none':
        out_ref[...] = nll                                         # lane-dense
    else:
        # Mask lanes past the real batch size (covers the 128-pad region and
        # any garbage read by a partial boundary block).
        lane = jax.lax.broadcasted_iota(jnp.int32, (1, TB), 1)
        valid = (pl.program_id(0) * tile_b + lane) < actual_b
        nll = jnp.where(valid, nll, 0.0)

        # Pairwise tree over 128-lane chunks (log-depth instead of a serial
        # TB/128-long add chain).  Slices are 128-aligned -> no relayout.
        chunks = [nll[:, k * 128:(k + 1) * 128] for k in range(TB // 128)]
        while len(chunks) > 1:
            nxt = [chunks[i] + chunks[i + 1]
                   for i in range(0, len(chunks) - 1, 2)]
            if len(chunks) % 2:
                nxt.append(chunks[-1])
            chunks = nxt
        out_ref[...] = chunks[0]                                   # [1, 128]


def _round_up(x, m):
    return (x + m - 1) // m * m


def _cdiv(a, b):
    return (a + b - 1) // b


def cumulative_link_loss(y_pred, y_true, reduction='elementwise_mean',
                         class_weights=None, tile_b=None):
    """Pallas implementation of cumulative_link_loss.

    y_pred : [B, C] float
    y_true : [B, 1] int
    """
    if reduction not in ('elementwise_mean', 'sum', 'none'):
        raise ValueError(f'{reduction} is not a valid reduction')

    y_pred = jnp.asarray(y_pred, jnp.float32)
    y_true = jnp.asarray(y_true, jnp.int32)
    B, C = y_pred.shape
    if y_true.ndim == 1:
        y_true = y_true.reshape(B, 1)

    use_weights = class_weights is not None

    B_pad = _round_up(B, 128)          # only pad to a lane multiple, not tile_b

    if tile_b is None:
        # ~4 MiB per buffer counting y_pred (C rows) + y_true (1) + out (1),
        # double buffered => ~8 MiB of explicit VMEM, safe on v5e/v6e/v7x.
        per_buf_bytes = 4 * 1024 * 1024
        tile_b = per_buf_bytes // ((C + 2) * 4)
        tile_b = max(128, min(tile_b, B_pad))
        # Round down to 128 * 2^k for a clean pairwise tree.
        tile_b = 128 * (1 << ((tile_b // 128).bit_length() - 1))
        # Keep >= 2 grid steps when B allows (v7x megacore sharding).
        while tile_b > 128 and _cdiv(B_pad, tile_b) < 2:
            tile_b //= 2
    else:
        tile_b = max(128, min(_round_up(tile_b, 128), B_pad))

    num_tiles = _cdiv(B_pad, tile_b)

    if B_pad != B:
        # Pad values are irrelevant: reduction paths mask in-kernel, the
        # 'none' path slices back to B.  XLA fuses this pad with the transpose.
        y_pred = jnp.pad(y_pred, ((0, B_pad - B), (0, 0)))
        y_true = jnp.pad(y_true, ((0, B_pad - B), (0, 0)))

    # TODO(synk): layout plumbing — a producer emitting [C, B] directly would
    # remove this extra HBM pass on a memory-bound op.
    yp_t = y_pred.T                                  # [C, B_pad] lane-dense
    yt_t = y_true.T                                  # [1, B_pad]

    in_specs = [
        pl.BlockSpec((C, tile_b), lambda i: (0, i)),
        pl.BlockSpec((1, tile_b), lambda i: (0, i)),
    ]
    args = [yp_t, yt_t]
    if use_weights:
        w = jnp.asarray(class_weights, jnp.float32).reshape(C, 1)
        in_specs.append(pl.BlockSpec((C, 1), lambda i: (0, 0)))
        args.append(w)

    if reduction == 'none':
        out_shape = jax.ShapeDtypeStruct((1, B_pad), jnp.float32)
        out_specs = pl.BlockSpec((1, tile_b), lambda i: (0, i))
    else:
        out_shape = jax.ShapeDtypeStruct((1, num_tiles * 128), jnp.float32)
        out_specs = pl.BlockSpec((1, 128), lambda i: (0, i))

    kernel = functools.partial(_cll_kernel, reduction=reduction,
                               use_weights=use_weights,
                               actual_b=B, tile_b=tile_b)

    result = pl.pallas_call(
        kernel,
        out_shape=out_shape,
        grid=(num_tiles,),
        in_specs=in_specs,
        out_specs=out_specs,
        compiler_params=pltpu.CompilerParams(
            dimension_semantics=("parallel",),
            vmem_limit_bytes=32 * 1024 * 1024),
    )(*args)

    if reduction == 'none':
        return result[0, :B].reshape(B, 1)            # matches torch shape [B,1]
    total = jnp.sum(result)                           # tiny (num_tiles*128) reduce
    if reduction == 'sum':
        return total
    return total / jnp.float32(B)                     # divide by ORIGINAL B


class CumulativeLinkLoss:
    def __init__(self, reduction='elementwise_mean', class_weights=None):
        self.reduction = reduction
        self.class_weights = class_weights

    def __call__(self, y_pred, y_true):
        return cumulative_link_loss(y_pred, y_true,
                                    reduction=self.reduction,
                                    class_weights=self.class_weights)


def _ref_loss(y_pred, y_true, reduction='elementwise_mean', class_weights=None):
    """Pure-JAX reference mirroring the PyTorch semantics (fp32)."""
    y_pred = jnp.asarray(y_pred, jnp.float32)
    y_true = jnp.asarray(y_true, jnp.int32)
    gathered = jnp.take_along_axis(y_pred, y_true, axis=1)
    lik = jnp.clip(gathered, _EPS, 1.0 - _EPS)
    nll = -jnp.log(lik)
    if class_weights is not None:
        cw = jnp.asarray(class_weights, nll.dtype)
        nll = nll * cw[y_true]
    if reduction == 'elementwise_mean':
        return nll.mean()
    if reduction == 'sum':
        return nll.sum()
    return nll


if __name__ == "__main__":
    key = jax.random.PRNGKey(0)
    ok = True

    # --- small shape consistent with the module: batch=8, classes=4 ---
    B, C = 8, 4
    k1, k2, k3, k4, k5, k6 = jax.random.split(key, 6)
    y_pred = jax.nn.softmax(jax.random.normal(k1, (B, C), jnp.float32), axis=-1)
    y_true = jax.random.randint(k2, (B, 1), 0, C, jnp.int32)
    class_weights = jnp.array([1.0, 2.0, 0.5, 1.5], jnp.float32)

    # Default module config.
    out = jax.block_until_ready(CumulativeLinkLoss()(y_pred, y_true))
    ref = _ref_loss(y_pred, y_true)
    ok &= bool(jnp.allclose(out, ref, rtol=1e-5, atol=1e-5))

    # Weighted + all reductions.
    for red in ('elementwise_mean', 'sum', 'none'):
        mod = CumulativeLinkLoss(reduction=red, class_weights=class_weights)
        out = jax.block_until_ready(mod(y_pred, y_true))
        ref = _ref_loss(y_pred, y_true, reduction=red,
                        class_weights=class_weights)
        ok &= bool(jnp.allclose(out, ref, rtol=1e-5, atol=1e-5))
        ok &= (out.shape == ref.shape)

    # --- multi-tile + remainder (B=300 -> pad to 384) ---
    B2 = 300
    y_pred2 = jax.nn.softmax(jax.random.normal(k3, (B2, C), jnp.float32), axis=-1)
    y_true2 = jax.random.randint(k4, (B2, 1), 0, C, jnp.int32)
    for red in ('elementwise_mean', 'sum', 'none'):
        ref = _ref_loss(y_pred2, y_true2, reduction=red,
                        class_weights=class_weights)
        # forced small tile (3 even tiles)
        out = jax.block_until_ready(
            cumulative_link_loss(y_pred2, y_true2, reduction=red,
                                 class_weights=class_weights, tile_b=128))
        ok &= bool(jnp.allclose(out, ref, rtol=1e-5, atol=1e-5))
        ok &= (out.shape == ref.shape)
        # auto tile (tile_b=256 -> partial boundary block)
        out = jax.block_until_ready(
            cumulative_link_loss(y_pred2, y_true2, reduction=red,
                                 class_weights=class_weights))
        ok &= bool(jnp.allclose(out, ref, rtol=1e-5, atol=1e-5))
        ok &= (out.shape == ref.shape)

    # --- larger batch, auto tile-sizing path (>=2 grid steps) ---
    B3 = 4096
    y_pred3 = jax.nn.softmax(jax.random.normal(k5, (B3, C), jnp.float32), axis=-1)
    y_true3 = jax.random.randint(k6, (B3, 1), 0, C, jnp.int32)
    out = jax.block_until_ready(
        cumulative_link_loss(y_pred3, y_true3, reduction='elementwise_mean'))
    ref = _ref_loss(y_pred3, y_true3, reduction='elementwise_mean')
    ok &= bool(jnp.allclose(out, ref, rtol=1e-5, atol=1e-5))

    if ok:
        print("KERNEL_OK")
    else:
        print("KERNEL_MISMATCH")
</pallas_src>

<mosaic_0001>
module attributes {stable_mosaic.version = 11 : i64} {
  func.func @_cll_kernel(%arg0: i32, %arg1: memref<4x128xf32, #tpu.memory_space<vmem>>, %arg2: memref<1x128xi32, #tpu.memory_space<vmem>>, %arg3: memref<1x128xf32, #tpu.memory_space<vmem>>) attributes {dimension_semantics = [#tpu.dimension_semantics<parallel>], iteration_bounds = array<i64: 1>, scalar_prefetch = 0 : i64, scratch_operands = 0 : i64, tpu.core_type = #tpu.core_type<tc>, window_params = [{transform_indices = @transform_0, window_bounds = array<i64: 4, 128>}, {transform_indices = @transform_1, window_bounds = array<i64: 1, 128>}, {transform_indices = @transform_2, window_bounds = array<i64: 1, 128>}]} {
    %c0 = arith.constant 0 : index
    %c0_0 = arith.constant 0 : index
    %0 = vector.load %arg1[%c0, %c0_0] : memref<4x128xf32, #tpu.memory_space<vmem>>, vector<4x128xf32>
    %c0_1 = arith.constant 0 : index
    %c0_2 = arith.constant 0 : index
    %1 = vector.load %arg2[%c0_1, %c0_2] : memref<1x128xi32, #tpu.memory_space<vmem>>, vector<1x128xi32>
    %2 = tpu.iota {dimensions = array<i32: 0>} : vector<4x128xi32>
    %3 = vector.broadcast %1 : vector<1x128xi32> to vector<4x128xi32>
    %4 = arith.cmpi eq, %2, %3 : vector<4x128xi32>
    %cst = arith.constant 0.000000e+00 : f32
    %5 = vector.broadcast %cst : f32 to vector<4x128xf32>
    %6 = arith.select %4, %0, %5 : vector<4x128xi1>, vector<4x128xf32>
    %cst_3 = arith.constant dense<0.000000e+00> : vector<128xf32>
    %7 = vector.multi_reduction <add>, %6, %cst_3 [0] : vector<4x128xf32> to vector<128xf32>
    %8 = vector.shape_cast %7 : vector<128xf32> to vector<1x128xf32>
    %cst_4 = arith.constant 1.000000e-15 : f32
    %cst_5 = arith.constant 1.000000e+00 : f32
    %9 = vector.broadcast %cst_4 : f32 to vector<1x128xf32>
    %10 = arith.maximumf %9, %8 : vector<1x128xf32>
    %11 = vector.broadcast %cst_5 : f32 to vector<1x128xf32>
    %12 = arith.minimumf %11, %10 : vector<1x128xf32>
    %13 = math.log %12 : vector<1x128xf32>
    %cst_6 = arith.constant 0.000000e+00 : f32
    %14 = vector.broadcast %cst_6 : f32 to vector<1x128xf32>
    %15 = arith.subf %14, %13 : vector<1x128xf32>
    %16 = tpu.iota {dimensions = array<i32: 1>} : vector<1x128xi32>
    %c128_i32 = arith.constant 128 : i32
    %17 = arith.muli %arg0, %c128_i32 : i32
    %18 = vector.broadcast %17 : i32 to vector<1x128xi32>
    %19 = arith.addi %18, %16 : vector<1x128xi32>
    %c8_i32 = arith.constant 8 : i32
    %20 = vector.broadcast %c8_i32 : i32 to vector<1x128xi32>
    %21 = arith.cmpi slt, %19, %20 : vector<1x128xi32>
    %cst_7 = arith.constant 0.000000e+00 : f32
    %22 = vector.broadcast %cst_7 : f32 to vector<1x128xf32>
    %23 = arith.select %21, %15, %22 : vector<1x128xi1>, vector<1x128xf32>
    %c0_8 = arith.constant 0 : index
    %c0_9 = arith.constant 0 : index
    %24 = vector.load %arg3[%c0_8, %c0_9] : memref<1x128xf32, #tpu.memory_space<vmem>>, vector<1x128xf32>
    tpu.vector_store %arg3[%c0_8, %c0_9], %23 {strides = array<i32>} : memref<1x128xf32, #tpu.memory_space<vmem>>, vector<1x128xf32>,
    return
  }
  func.func @transform_0(%arg0: i32) -> (i32, i32) {
    %c0_i32 = arith.constant 0 : i32
    %c0_i32_0 = arith.constant 0 : i32
    return %c0_i32, %arg0 : i32, i32
  }
  func.func @transform_1(%arg0: i32) -> (i32, i32) {
    %c0_i32 = arith.constant 0 : i32
    %c0_i32_0 = arith.constant 0 : i32
    return %c0_i32, %arg0 : i32, i32
  }
  func.func @transform_2(%arg0: i32) -> (i32, i32) {
    %c0_i32 = arith.constant 0 : i32
    %c0_i32_0 = arith.constant 0 : i32
    return %c0_i32, %arg0 : i32, i32
  }
}

</mosaic_0001>

<llo_original>
// kernel: tpu_custom_call.1
$region0: #{tpu_custom_call.1}
  #allocation0 [shape = 'u32[]', space=smem, size = 0x4, offset = 0x4, fixed_abs, tag = 'smem constant byte address 0x4 - core index']
  #allocation1 [shape = 'u32[144,128]{1,0:T(1,128)}', space=vmem, size = 0x12000, scoped, tag = 'internal scratch']
  %s0 = inlined_call_operand.hbm [shape: f32[4,128], index: 0, kind: input, shape index: {}]
  %s1 = inlined_call_operand.vmem [shape: s32[1,128], index: 1, kind: input, shape index: {}]
  %s2 = inlined_call_operand.hbm [shape: f32[1,128], index: 2, kind: output, shape index: {}]
  %s3 = sld [smem:[#allocation0]]
  $region22: #{tpu_custom_call.1} parent=0
    _
  %s5 = ssub.s32 1, %s3
  %s6 = scalar_select 0, %s5, %s3
  $region1: #{tpu_custom_call.1} parent=0
    #allocation2 [shape = 'u8[2048]{0}', space=vmem, size = 0x800, scoped, tag = 'input window, operand 0, single buffered']
    #allocation3 [shape = 's32[1]{0}', space=sflag, size = 0x4, scoped, tag = 'scoped memory for tpu_custom_call.1']
    #allocation4 [shape = 's32[1]{0}', space=sflag, size = 0x4, scoped, tag = 'scoped memory for tpu_custom_call.1']
    #allocation5 [shape = 'u8[512]{0}', space=vmem, size = 0x400, scoped, tag = 'output window, operand 0, single buffered']
    %7 = vsyncpa [#allocation3], 0
    %8 = vsyncpa [#allocation4], 0
    // Predicated region
    $region2: #{tpu_custom_call.1} parent=1 // pred_check
      _
    $region3: #{tpu_custom_call.1} parent=1 // pred_check_branch
      %10 = sbr.rel (0) target = $region5
    $region4: #{tpu_custom_call.1} parent=1 // pred_region
      %s12 = ssub.s32 64, 64
      %13 = vsyncadd [#allocation3], %s12
      %s15 = sshll.u32 [#allocation2], 4
      %s16 = int_to_ptr.vmem [resolvable:$true] %s15
      %18 = dma.hbm_to_vmem [thread:$0]  %s0, 64, %s16, [#allocation3]
    $region5: #{tpu_custom_call.1} parent=1 // pred_fallthru
      _
    // Predicated region
    $region6: #{tpu_custom_call.1} parent=1 // pred_check
      _
    $region7: #{tpu_custom_call.1} parent=1 // pred_check_branch
      %20 = sbr.rel (0) target = $region9
    $region8: #{tpu_custom_call.1} parent=1 // pred_region
      _
    $region9: #{tpu_custom_call.1} parent=1 // pred_fallthru
      _
    // Predicated region
    $region10: #{tpu_custom_call.1} parent=1 // pred_check
      _
    $region11: #{tpu_custom_call.1} parent=1 // pred_check_branch
      %22 = sbr.rel (0) target = $region13
    $region12: #{tpu_custom_call.1} parent=1 // pred_region
      %23 = dma.done [#allocation3], 64
    $region13: #{tpu_custom_call.1} parent=1 // pred_fallthru
      _
    %v24 = vld [vmem:[#allocation2] sm:$0xf]
    %v25 = vld [vmem:[%s1] sm:$0x1]
    %v26 = vlaneseq
    %v27 = vshrl.u32 %v26, 7
    %v28 = vlaneseq
    %v29 = vshrl.u32 %v28, 7
    %v30 = vsub.s32 0, %v29
    %v31 = vrot.slane %v25, %v30
    %vm32 = vcmp.eq.s32.totalorder %v27, %v31
    %v33 = vsel %vm32, %v24, 0.0
    %vm34 = vcmask 1043456
    %v35 = vsel %vm34, %v33, 0.0
    %v36 = vrot.slane %v35, 4
    %v37 = vadd.f32 %v35, %v36
    %v38 = vrot.slane %v37, 2
    %v39 = vadd.f32 %v37, %v38
    %v40 = vrot.slane %v39, 1
    %v41 = vadd.f32 %v39, %v40
    %v42 = vmax.f32 %v41, 1e-15
    %v43 = vmin.f32 %v42, 1.0
    %v44 = vlog2.pop %v43
    %v45 = vmul.f32 %v44, 0.6931472
    %v46 = vsub.f32 0.0, %v45
    %v47 = vlaneseq
    %v48 = vand.u32 %v47, 127
    %s49 = smul.u32 0, 128
    %v50 = vstv %s49
    %v51 = vadd.s32 %v50, %v48
    %vm52 = vcmp.lt.s32.totalorder %v51, 8
    %v53 = vsel %vm52, %v46, 0.0
    %54 = vst [vmem:[#allocation5] sm:$0x1] %v53
    // Predicated region
    $region14: #{tpu_custom_call.1} parent=1 // pred_check
      _
    $region15: #{tpu_custom_call.1} parent=1 // pred_check_branch
      %56 = sbr.rel (0) target = $region17
    $region16: #{tpu_custom_call.1} parent=1 // pred_region
      %s58 = ssub.s32 16, 16
      %59 = vsyncadd [#allocation4], %s58
      %s61 = sshll.u32 [#allocation5], 4
      %s62 = int_to_ptr.vmem [resolvable:$true] %s61
      %64 = dma.vmem_to_hbm [thread:$0]  %s62, 16, %s2, [#allocation4]
    $region17: #{tpu_custom_call.1} parent=1 // pred_fallthru
      _
    // Predicated region
    $region18: #{tpu_custom_call.1} parent=1 // pred_check
      _
    $region19: #{tpu_custom_call.1} parent=1 // pred_check_branch
      %66 = sbr.rel (0) target = $region21
    $region20: #{tpu_custom_call.1} parent=1 // pred_region
      %67 = dma.done [#allocation4], 16
    $region21: #{tpu_custom_call.1} parent=1 // pred_fallthru
      _
    %68 = vsyncpa [#allocation3], 1
    %69 = vsyncpa [#allocation4], 1

</llo_original>
